<compile_context>
chip_gen: v5e
topology: v5e:2x2
jax: 0.10.0
libtpu: 0.0.40
codegen_flags: <defaults>
</compile_context>

<pallas_src>
import jax
import jax.numpy as jnp
from jax.experimental import pallas as pl
from jax.experimental.pallas import tpu as pltpu


def _rowpair_max_kernel(x_ref, o_ref):
    # x_ref: (TR, 2, W)  row-pair-major view of the raw input block
    # o_ref: (TR, W)     max over the vertical pair (pure VPU vmax)
    r0 = x_ref[:, 0, :]
    r1 = x_ref[:, 1, :]
    o_ref[...] = jnp.maximum(r0, r1)


def _pick_row_tile(rows, w, itemsize, target_bytes=4 << 20):
    """Rows per grid step: ~target_bytes of input per block, multiple of 8."""
    row_bytes = 2 * w * itemsize          # one output row consumes 2 input rows
    cap = max(1, target_bytes // row_bytes)
    if rows <= cap:
        return rows                        # single block; block == full dim is legal
    return max(8, (cap // 8) * 8)          # keep output sublane dim 8-aligned


def maxpool2d_2x2_pallas(x):
    """nn.MaxPool2d(kernel_size=2, stride=2) on NCHW input via Pallas."""
    N, C, H, W = x.shape
    assert H % 2 == 0 and W % 2 == 0, "2x2/stride-2 pooling needs even H, W"
    # TODO(synk): nn.MaxPool2d silently floor-drops a trailing odd row/col;
    # odd H/W are not supported here (assert instead).
    Ho, Wo = H // 2, W // 2
    R = N * C * Ho
    itemsize = x.dtype.itemsize

    xv = x.reshape(R, 2, W)                # free regroup, no HBM round trip
    tr = _pick_row_tile(R, W, itemsize)
    grid = (pl.cdiv(R, tr),)

    rowmax = pl.pallas_call(
        _rowpair_max_kernel,
        out_shape=jax.ShapeDtypeStruct((R, W), x.dtype),
        grid_spec=pltpu.PrefetchScalarGridSpec(
            num_scalar_prefetch=0,
            grid=grid,
            in_specs=[
                # last two dims (2, W) equal the full array dims -> valid block
                pl.BlockSpec((tr, 2, W), lambda i: (i, 0, 0)),
            ],
            out_specs=pl.BlockSpec((tr, W), lambda i: (i, 0)),
        ),
        compiler_params=pltpu.CompilerParams(
            dimension_semantics=("parallel",),
        ),
        cost_estimate=pl.CostEstimate(
            flops=R * W,
            transcendentals=0,
            bytes_accessed=(xv.size + R * W) * itemsize,
        ),
    )(xv)

    # Adjacent-column pair max: stride-2 lane selection, left to one fused XLA
    # pass over the half-size intermediate (no reliable in-kernel lowering).
    y = rowmax.reshape(N, C, Ho, Wo, 2).max(axis=-1)
    return y


def fake_s_module_forward(xC):
    """Pallas equivalent of FakeSModule(nn.MaxPool2d(2)).forward(xC)."""
    x, _xS = xC
    y = maxpool2d_2x2_pallas(x)
    return (y, None)


if __name__ == "__main__":
    key = jax.random.PRNGKey(0)
    x = jax.random.normal(key, (2, 4, 16, 16), dtype=jnp.float32)
    xS = None

    y, y_s = fake_s_module_forward((x, xS))
    y = jax.block_until_ready(y)

    # correctness check against a pure-JAX reference
    ref = x.reshape(2, 4, 8, 2, 8, 2).max(axis=(3, 5))
    assert y.shape == (2, 4, 8, 8)
    assert y_s is None
    assert jnp.allclose(y, ref), "Pallas maxpool mismatch vs reference"

    print("KERNEL_OK")
</pallas_src>

<mosaic_0001>
module attributes {stable_mosaic.version = 11 : i64} {
  func.func @_rowpair_max_kernel(%arg0: i32, %arg1: memref<64x2x16xf32, #tpu.memory_space<vmem>>, %arg2: memref<64x16xf32, #tpu.memory_space<vmem>>) attributes {dimension_semantics = [#tpu.dimension_semantics<parallel>], iteration_bounds = array<i64: 1>, scalar_prefetch = 0 : i64, scratch_operands = 0 : i64, tpu.core_type = #tpu.core_type<tc>, window_params = [{transform_indices = @transform_0, window_bounds = array<i64: 64, 2, 16>}, {transform_indices = @transform_1, window_bounds = array<i64: 64, 16>}]} {
    %c0 = arith.constant 0 : index
    %c0_0 = arith.constant 0 : index
    %c0_1 = arith.constant 0 : index
    %0 = vector.load %arg1[%c0, %c0_0, %c0_1] : memref<64x2x16xf32, #tpu.memory_space<vmem>>, vector<64x1x16xf32>
    %1 = vector.shape_cast %0 : vector<64x1x16xf32> to vector<64x16xf32>
    %c0_2 = arith.constant 0 : index
    %c1 = arith.constant 1 : index
    %c0_3 = arith.constant 0 : index
    %2 = vector.load %arg1[%c0_2, %c1, %c0_3] : memref<64x2x16xf32, #tpu.memory_space<vmem>>, vector<64x1x16xf32>
    %3 = vector.shape_cast %2 : vector<64x1x16xf32> to vector<64x16xf32>
    %4 = arith.maximumf %1, %3 : vector<64x16xf32>
    %c0_4 = arith.constant 0 : index
    %c0_5 = arith.constant 0 : index
    %5 = vector.load %arg2[%c0_4, %c0_5] : memref<64x16xf32, #tpu.memory_space<vmem>>, vector<64x16xf32>
    tpu.vector_store %arg2[%c0_4, %c0_5], %4 {strides = array<i32>} : memref<64x16xf32, #tpu.memory_space<vmem>>, vector<64x16xf32>,
    return
  }
  func.func @transform_0(%arg0: i32) -> (i32, i32, i32) {
    %c0_i32 = arith.constant 0 : i32
    %c0_i32_0 = arith.constant 0 : i32
    %c0_i32_1 = arith.constant 0 : i32
    return %arg0, %c0_i32, %c0_i32_0 : i32, i32, i32
  }
  func.func @transform_1(%arg0: i32) -> (i32, i32) {
    %c0_i32 = arith.constant 0 : i32
    %c0_i32_0 = arith.constant 0 : i32
    return %arg0, %c0_i32 : i32, i32
  }
}

</mosaic_0001>

<llo_original>
// kernel: tpu_custom_call.1
$region0: #{tpu_custom_call.1}
  #allocation0 [shape = 'u32[]', space=smem, size = 0x4, offset = 0x4, fixed_abs, tag = 'smem constant byte address 0x4 - core index']
  #allocation1 [shape = 'u32[72,128]{1,0:T(1,128)}', space=vmem, size = 0x9000, scoped, tag = 'internal scratch']
  %s0 = inlined_call_operand.vmem [shape: f32[64,2,16], index: 0, kind: input, shape index: {}]
  %s1 = inlined_call_operand.vmem [shape: f32[64,16], index: 1, kind: output, shape index: {}]
  %s2 = sld [smem:[#allocation0]]
  $region14: #{tpu_custom_call.1} parent=0
    _
  %s4 = ssub.s32 1, %s2
  %s5 = scalar_select 0, %s4, %s2
  // Predicated region
  $region2: #{tpu_custom_call.1} parent=0 // pred_check
    _
  $region3: #{tpu_custom_call.1} parent=0 // pred_check_branch
    %7 = sbr.rel (0) target = $region5
  $region4: #{tpu_custom_call.1} parent=0 // pred_region
    _
  $region5: #{tpu_custom_call.1} parent=0 // pred_fallthru
    _
  %v8 = vld [vmem:[%s0] sm:$0x1]
  %v9 = vld [vmem:[%s0 + $0x2] sm:$0x1]
  %v10 = vld [vmem:[%s0 + $0x4] sm:$0x1]
  %v11 = vld [vmem:[%s0 + $0x6] sm:$0x1]
  %v12 = vld [vmem:[%s0 + $0x8] sm:$0x1]
  %v13 = vld [vmem:[%s0 + $0xa] sm:$0x1]
  %v14 = vld [vmem:[%s0 + $0xc] sm:$0x1]
  %v15 = vld [vmem:[%s0 + $0xe] sm:$0x1]
  %v16 = vld [vmem:[%s0 + $0x10] sm:$0x1]
  %v17 = vld [vmem:[%s0 + $0x12] sm:$0x1]
  %v18 = vld [vmem:[%s0 + $0x14] sm:$0x1]
  %v19 = vld [vmem:[%s0 + $0x16] sm:$0x1]
  %v20 = vld [vmem:[%s0 + $0x18] sm:$0x1]
  %v21 = vld [vmem:[%s0 + $0x1a] sm:$0x1]
  %v22 = vld [vmem:[%s0 + $0x1c] sm:$0x1]
  %v23 = vld [vmem:[%s0 + $0x1e] sm:$0x1]
  %v24 = vld [vmem:[%s0 + $0x20] sm:$0x1]
  %v25 = vld [vmem:[%s0 + $0x22] sm:$0x1]
  %v26 = vld [vmem:[%s0 + $0x24] sm:$0x1]
  %v27 = vld [vmem:[%s0 + $0x26] sm:$0x1]
  %v28 = vld [vmem:[%s0 + $0x28] sm:$0x1]
  %v29 = vld [vmem:[%s0 + $0x2a] sm:$0x1]
  %v30 = vld [vmem:[%s0 + $0x2c] sm:$0x1]
  %v31 = vld [vmem:[%s0 + $0x2e] sm:$0x1]
  %v32 = vld [vmem:[%s0 + $0x30] sm:$0x1]
  %v33 = vld [vmem:[%s0 + $0x32] sm:$0x1]
  %v34 = vld [vmem:[%s0 + $0x34] sm:$0x1]
  %v35 = vld [vmem:[%s0 + $0x36] sm:$0x1]
  %v36 = vld [vmem:[%s0 + $0x38] sm:$0x1]
  %v37 = vld [vmem:[%s0 + $0x3a] sm:$0x1]
  %v38 = vld [vmem:[%s0 + $0x3c] sm:$0x1]
  %v39 = vld [vmem:[%s0 + $0x3e] sm:$0x1]
  %v40 = vld [vmem:[%s0 + $0x40] sm:$0x1]
  %v41 = vld [vmem:[%s0 + $0x42] sm:$0x1]
  %v42 = vld [vmem:[%s0 + $0x44] sm:$0x1]
  %v43 = vld [vmem:[%s0 + $0x46] sm:$0x1]
  %v44 = vld [vmem:[%s0 + $0x48] sm:$0x1]
  %v45 = vld [vmem:[%s0 + $0x4a] sm:$0x1]
  %v46 = vld [vmem:[%s0 + $0x4c] sm:$0x1]
  %v47 = vld [vmem:[%s0 + $0x4e] sm:$0x1]
  %v48 = vld [vmem:[%s0 + $0x50] sm:$0x1]
  %v49 = vld [vmem:[%s0 + $0x52] sm:$0x1]
  %v50 = vld [vmem:[%s0 + $0x54] sm:$0x1]
  %v51 = vld [vmem:[%s0 + $0x56] sm:$0x1]
  %v52 = vld [vmem:[%s0 + $0x58] sm:$0x1]
  %v53 = vld [vmem:[%s0 + $0x5a] sm:$0x1]
  %v54 = vld [vmem:[%s0 + $0x5c] sm:$0x1]
  %v55 = vld [vmem:[%s0 + $0x5e] sm:$0x1]
  %v56 = vld [vmem:[%s0 + $0x60] sm:$0x1]
  %v57 = vld [vmem:[%s0 + $0x62] sm:$0x1]
  %v58 = vld [vmem:[%s0 + $0x64] sm:$0x1]
  %v59 = vld [vmem:[%s0 + $0x66] sm:$0x1]
  %v60 = vld [vmem:[%s0 + $0x68] sm:$0x1]
  %v61 = vld [vmem:[%s0 + $0x6a] sm:$0x1]
  %v62 = vld [vmem:[%s0 + $0x6c] sm:$0x1]
  %v63 = vld [vmem:[%s0 + $0x6e] sm:$0x1]
  %v64 = vld [vmem:[%s0 + $0x70] sm:$0x1]
  %v65 = vld [vmem:[%s0 + $0x72] sm:$0x1]
  %v66 = vld [vmem:[%s0 + $0x74] sm:$0x1]
  %v67 = vld [vmem:[%s0 + $0x76] sm:$0x1]
  %v68 = vld [vmem:[%s0 + $0x78] sm:$0x1]
  %v69 = vld [vmem:[%s0 + $0x7a] sm:$0x1]
  %v70 = vld [vmem:[%s0 + $0x7c] sm:$0x1]
  %v71 = vld [vmem:[%s0 + $0x7e] sm:$0x1]
  %v72 = vld [vmem:[%s0 + $0x1] sm:$0x1]
  %v73 = vld [vmem:[%s0 + $0x3] sm:$0x1]
  %v74 = vld [vmem:[%s0 + $0x5] sm:$0x1]
  %v75 = vld [vmem:[%s0 + $0x7] sm:$0x1]
  %v76 = vld [vmem:[%s0 + $0x9] sm:$0x1]
  %v77 = vld [vmem:[%s0 + $0xb] sm:$0x1]
  %v78 = vld [vmem:[%s0 + $0xd] sm:$0x1]
  %v79 = vld [vmem:[%s0 + $0xf] sm:$0x1]
  %v80 = vld [vmem:[%s0 + $0x11] sm:$0x1]
  %v81 = vld [vmem:[%s0 + $0x13] sm:$0x1]
  %v82 = vld [vmem:[%s0 + $0x15] sm:$0x1]
  %v83 = vld [vmem:[%s0 + $0x17] sm:$0x1]
  %v84 = vld [vmem:[%s0 + $0x19] sm:$0x1]
  %v85 = vld [vmem:[%s0 + $0x1b] sm:$0x1]
  %v86 = vld [vmem:[%s0 + $0x1d] sm:$0x1]
  %v87 = vld [vmem:[%s0 + $0x1f] sm:$0x1]
  %v88 = vld [vmem:[%s0 + $0x21] sm:$0x1]
  %v89 = vld [vmem:[%s0 + $0x23] sm:$0x1]
  %v90 = vld [vmem:[%s0 + $0x25] sm:$0x1]
  %v91 = vld [vmem:[%s0 + $0x27] sm:$0x1]
  %v92 = vld [vmem:[%s0 + $0x29] sm:$0x1]
  %v93 = vld [vmem:[%s0 + $0x2b] sm:$0x1]
  %v94 = vld [vmem:[%s0 + $0x2d] sm:$0x1]
  %v95 = vld [vmem:[%s0 + $0x2f] sm:$0x1]
  %v96 = vld [vmem:[%s0 + $0x31] sm:$0x1]
  %v97 = vld [vmem:[%s0 + $0x33] sm:$0x1]
  %v98 = vld [vmem:[%s0 + $0x35] sm:$0x1]
  %v99 = vld [vmem:[%s0 + $0x37] sm:$0x1]
  %v100 = vld [vmem:[%s0 + $0x39] sm:$0x1]
  %v101 = vld [vmem:[%s0 + $0x3b] sm:$0x1]
  %v102 = vld [vmem:[%s0 + $0x3d] sm:$0x1]
  %v103 = vld [vmem:[%s0 + $0x3f] sm:$0x1]
  %v104 = vld [vmem:[%s0 + $0x41] sm:$0x1]
  %v105 = vld [vmem:[%s0 + $0x43] sm:$0x1]
  %v106 = vld [vmem:[%s0 + $0x45] sm:$0x1]
  %v107 = vld [vmem:[%s0 + $0x47] sm:$0x1]
  %v108 = vld [vmem:[%s0 + $0x49] sm:$0x1]
  %v109 = vld [vmem:[%s0 + $0x4b] sm:$0x1]
  %v110 = vld [vmem:[%s0 + $0x4d] sm:$0x1]
  %v111 = vld [vmem:[%s0 + $0x4f] sm:$0x1]
  %v112 = vld [vmem:[%s0 + $0x51] sm:$0x1]
  %v113 = vld [vmem:[%s0 + $0x53] sm:$0x1]
  %v114 = vld [vmem:[%s0 + $0x55] sm:$0x1]
  %v115 = vld [vmem:[%s0 + $0x57] sm:$0x1]
  %v116 = vld [vmem:[%s0 + $0x59] sm:$0x1]
  %v117 = vld [vmem:[%s0 + $0x5b] sm:$0x1]
  %v118 = vld [vmem:[%s0 + $0x5d] sm:$0x1]
  %v119 = vld [vmem:[%s0 + $0x5f] sm:$0x1]
  %v120 = vld [vmem:[%s0 + $0x61] sm:$0x1]
  %v121 = vld [vmem:[%s0 + $0x63] sm:$0x1]
  %v122 = vld [vmem:[%s0 + $0x65] sm:$0x1]
  %v123 = vld [vmem:[%s0 + $0x67] sm:$0x1]
  %v124 = vld [vmem:[%s0 + $0x69] sm:$0x1]
  %v125 = vld [vmem:[%s0 + $0x6b] sm:$0x1]
  %v126 = vld [vmem:[%s0 + $0x6d] sm:$0x1]
  %v127 = vld [vmem:[%s0 + $0x6f] sm:$0x1]
  %v128 = vld [vmem:[%s0 + $0x71] sm:$0x1]
  %v129 = vld [vmem:[%s0 + $0x73] sm:$0x1]
  %v130 = vld [vmem:[%s0 + $0x75] sm:$0x1]
  %v131 = vld [vmem:[%s0 + $0x77] sm:$0x1]
  %v132 = vld [vmem:[%s0 + $0x79] sm:$0x1]
  %v133 = vld [vmem:[%s0 + $0x7b] sm:$0x1]
  %v134 = vld [vmem:[%s0 + $0x7d] sm:$0x1]
  %v135 = vld [vmem:[%s0 + $0x7f] sm:$0x1]
  %v136 = vmax.f32 %v8, %v72
  %v137 = vmax.f32 %v9, %v73
  %v138 = vmax.f32 %v10, %v74
  %v139 = vmax.f32 %v11, %v75
  %v140 = vmax.f32 %v12, %v76
  %v141 = vmax.f32 %v13, %v77
  %v142 = vmax.f32 %v14, %v78
  %v143 = vmax.f32 %v15, %v79
  %v144 = vmax.f32 %v16, %v80
  %v145 = vmax.f32 %v17, %v81
  %v146 = vmax.f32 %v18, %v82
  %v147 = vmax.f32 %v19, %v83
  %v148 = vmax.f32 %v20, %v84
  %v149 = vmax.f32 %v21, %v85
  %v150 = vmax.f32 %v22, %v86
  %v151 = vmax.f32 %v23, %v87
  %v152 = vmax.f32 %v24, %v88
  %v153 = vmax.f32 %v25, %v89
  %v154 = vmax.f32 %v26, %v90
  %v155 = vmax.f32 %v27, %v91
  %v156 = vmax.f32 %v28, %v92
  %v157 = vmax.f32 %v29, %v93
  %v158 = vmax.f32 %v30, %v94
  %v159 = vmax.f32 %v31, %v95
  %v160 = vmax.f32 %v32, %v96
  %v161 = vmax.f32 %v33, %v97
  %v162 = vmax.f32 %v34, %v98
  %v163 = vmax.f32 %v35, %v99
  %v164 = vmax.f32 %v36, %v100
  %v165 = vmax.f32 %v37, %v101
  %v166 = vmax.f32 %v38, %v102
  %v167 = vmax.f32 %v39, %v103
  %v168 = vmax.f32 %v40, %v104
  %v169 = vmax.f32 %v41, %v105
  %v170 = vmax.f32 %v42, %v106
  %v171 = vmax.f32 %v43, %v107
  %v172 = vmax.f32 %v44, %v108
  %v173 = vmax.f32 %v45, %v109
  %v174 = vmax.f32 %v46, %v110
  %v175 = vmax.f32 %v47, %v111
  %v176 = vmax.f32 %v48, %v112
  %v177 = vmax.f32 %v49, %v113
  %v178 = vmax.f32 %v50, %v114
  %v179 = vmax.f32 %v51, %v115
  %v180 = vmax.f32 %v52, %v116
  %v181 = vmax.f32 %v53, %v117
  %v182 = vmax.f32 %v54, %v118
  %v183 = vmax.f32 %v55, %v119
  %v184 = vmax.f32 %v56, %v120
  %v185 = vmax.f32 %v57, %v121
  %v186 = vmax.f32 %v58, %v122
  %v187 = vmax.f32 %v59, %v123
  %v188 = vmax.f32 %v60, %v124
  %v189 = vmax.f32 %v61, %v125
  %v190 = vmax.f32 %v62, %v126
  %v191 = vmax.f32 %v63, %v127
  %v192 = vmax.f32 %v64, %v128
  %v193 = vmax.f32 %v65, %v129
  %v194 = vmax.f32 %v66, %v130
  %v195 = vmax.f32 %v67, %v131
  %v196 = vmax.f32 %v68, %v132
  %v197 = vmax.f32 %v69, %v133
  %v198 = vmax.f32 %v70, %v134
  %v199 = vmax.f32 %v71, %v135
  %v264 = vrot.slane %v137, 7
  %vm265 = vcmask 1041409
  %v266 = vsel %vm265, %v264, %v136
  %v267 = vrot.slane %v138, 6
  %vm268 = vcmask 1042434
  %v269 = vsel %vm268, %v267, %v266
  %v270 = vrot.slane %v139, 5
  %vm271 = vcmask 1043459
  %v272 = vsel %vm271, %v270, %v269
  %v273 = vrot.slane %v140, 4
  %vm274 = vcmask 1044484
  %v275 = vsel %vm274, %v273, %v272
  %v276 = vrot.slane %v141, 3
  %vm277 = vcmask 1045509
  %v278 = vsel %vm277, %v276, %v275
  %v279 = vrot.slane %v142, 2
  %vm280 = vcmask 1046534
  %v281 = vsel %vm280, %v279, %v278
  %v282 = vrot.slane %v143, 1
  %vm283 = vcmask 1047559
  %v284 = vsel %vm283, %v282, %v281
  %v285 = vrot.slane %v145, 7
  %v286 = vsel %vm265, %v285, %v144
  %v287 = vrot.slane %v146, 6
  %v288 = vsel %vm268, %v287, %v286
  %v289 = vrot.slane %v147, 5
  %v290 = vsel %vm271, %v289, %v288
  %v291 = vrot.slane %v148, 4
  %v292 = vsel %vm274, %v291, %v290
  %v293 = vrot.slane %v149, 3
  %v294 = vsel %vm277, %v293, %v292
  %v295 = vrot.slane %v150, 2
  %v296 = vsel %vm280, %v295, %v294
  %v297 = vrot.slane %v151, 1
  %v298 = vsel %vm283, %v297, %v296
  %v299 = vrot.slane %v153, 7
  %v300 = vsel %vm265, %v299, %v152
  %v301 = vrot.slane %v154, 6
  %v302 = vsel %vm268, %v301, %v300
  %v303 = vrot.slane %v155, 5
  %v304 = vsel %vm271, %v303, %v302
  %v305 = vrot.slane %v156, 4
  %v306 = vsel %vm274, %v305, %v304
  %v307 = vrot.slane %v157, 3
  %v308 = vsel %vm277, %v307, %v306
  %v309 = vrot.slane %v158, 2
  %v310 = vsel %vm280, %v309, %v308
  %v311 = vrot.slane %v159, 1
  %v312 = vsel %vm283, %v311, %v310
  %v313 = vrot.slane %v161, 7
  %v314 = vsel %vm265, %v313, %v160
  %v315 = vrot.slane %v162, 6
  %v316 = vsel %vm268, %v315, %v314
  %v317 = vrot.slane %v163, 5
  %v318 = vsel %vm271, %v317, %v316
  %v319 = vrot.slane %v164, 4
  %v320 = vsel %vm274, %v319, %v318
  %v321 = vrot.slane %v165, 3
  %v322 = vsel %vm277, %v321, %v320
  %v323 = vrot.slane %v166, 2
  %v324 = vsel %vm280, %v323, %v322
  %v325 = vrot.slane %v167, 1
  %v326 = vsel %vm283, %v325, %v324
  %v327 = vrot.slane %v169, 7
  %v328 = vsel %vm265, %v327, %v168
  %v329 = vrot.slane %v170, 6
  %v330 = vsel %vm268, %v329, %v328
  %v331 = vrot.slane %v171, 5
  %v332 = vsel %vm271, %v331, %v330
  %v333 = vrot.slane %v172, 4
  %v334 = vsel %vm274, %v333, %v332
  %v335 = vrot.slane %v173, 3
  %v336 = vsel %vm277, %v335, %v334
  %v337 = vrot.slane %v174, 2
  %v338 = vsel %vm280, %v337, %v336
  %v339 = vrot.slane %v175, 1
  %v340 = vsel %vm283, %v339, %v338
  %v341 = vrot.slane %v177, 7
  %v342 = vsel %vm265, %v341, %v176
  %v343 = vrot.slane %v178, 6
  %v344 = vsel %vm268, %v343, %v342
  %v345 = vrot.slane %v179, 5
  %v346 = vsel %vm271, %v345, %v344
  %v347 = vrot.slane %v180, 4
  %v348 = vsel %vm274, %v347, %v346
  %v349 = vrot.slane %v181, 3
  %v350 = vsel %vm277, %v349, %v348
  %v351 = vrot.slane %v182, 2
  %v352 = vsel %vm280, %v351, %v350
  %v353 = vrot.slane %v183, 1
  %v354 = vsel %vm283, %v353, %v352
  %v355 = vrot.slane %v185, 7
  %v356 = vsel %vm265, %v355, %v184
  %v357 = vrot.slane %v186, 6
  %v358 = vsel %vm268, %v357, %v356
  %v359 = vrot.slane %v187, 5
  %v360 = vsel %vm271, %v359, %v358
  %v361 = vrot.slane %v188, 4
  %v362 = vsel %vm274, %v361, %v360
  %v363 = vrot.slane %v189, 3
  %v364 = vsel %vm277, %v363, %v362
  %v365 = vrot.slane %v190, 2
  %v366 = vsel %vm280, %v365, %v364
  %v367 = vrot.slane %v191, 1
  %v368 = vsel %vm283, %v367, %v366
  %v369 = vrot.slane %v193, 7
  %v370 = vsel %vm265, %v369, %v192
  %v371 = vrot.slane %v194, 6
  %v372 = vsel %vm268, %v371, %v370
  %v373 = vrot.slane %v195, 5
  %v374 = vsel %vm271, %v373, %v372
  %v375 = vrot.slane %v196, 4
  %v376 = vsel %vm274, %v375, %v374
  %v377 = vrot.slane %v197, 3
  %v378 = vsel %vm277, %v377, %v376
  %v379 = vrot.slane %v198, 2
  %v380 = vsel %vm280, %v379, %v378
  %v381 = vrot.slane %v199, 1
  %v382 = vsel %vm283, %v381, %v380
  %vm391 = vcmask 130048
  %392 = vst.msk [vmem:[%s1] sm:$0xff] %vm391, %v284
  %393 = vst.msk [vmem:[%s1 + $0x8] sm:$0xff] %vm391, %v298
  %394 = vst.msk [vmem:[%s1 + $0x10] sm:$0xff] %vm391, %v312
  %395 = vst.msk [vmem:[%s1 + $0x18] sm:$0xff] %vm391, %v326
  %396 = vst.msk [vmem:[%s1 + $0x20] sm:$0xff] %vm391, %v340
  %397 = vst.msk [vmem:[%s1 + $0x28] sm:$0xff] %vm391, %v354
  %398 = vst.msk [vmem:[%s1 + $0x30] sm:$0xff] %vm391, %v368
  %399 = vst.msk [vmem:[%s1 + $0x38] sm:$0xff] %vm391, %v382
  // Predicated region
  $region6: #{tpu_custom_call.1} parent=0 // pred_check
    _
  $region7: #{tpu_custom_call.1} parent=0 // pred_check_branch
    %401 = sbr.rel (0) target = $region9
  $region8: #{tpu_custom_call.1} parent=0 // pred_region
    _
  $region9: #{tpu_custom_call.1} parent=0 // pred_fallthru
    _
  // Predicated region
  $region10: #{tpu_custom_call.1} parent=0 // pred_check
    _
  $region11: #{tpu_custom_call.1} parent=0 // pred_check_branch
    %403 = sbr.rel (0) target = $region13
  $region12: #{tpu_custom_call.1} parent=0 // pred_region
    _
  $region13: #{tpu_custom_call.1} parent=0 // pred_fallthru
    _

</llo_original>
